<compile_context>
chip_gen: v7x
topology: tpu7x:2x2x1
jax: 0.10.0
libtpu: 0.0.40
codegen_flags: <defaults>
</compile_context>

<pallas_src>
import jax
import jax.numpy as jnp
import numpy as np
from jax.experimental import pallas as pl
from jax.experimental.pallas import tpu as pltpu


def tutorial_attention_kernel(
    emb_ref,        # [Bt, E]        decoder_embeds[0] tile
    hid_ref,        # [Bt, H]        decoder_past_hidden[0] tile
    enc_ref,        # [S, Bt, 2H]    encoder_states tile (native layout, no permute)
    w_attn_e_ref,   # [E, S]         attn weight (embed part), pre-transposed + pre-sliced
    w_attn_h_ref,   # [H, S]         attn weight (hidden part), pre-transposed + pre-sliced
    b_attn_ref,     # [1, S]         attn bias, pre-sliced
    w_comb_e_ref,   # [E, E]         attn_combine weight (embed part), pre-transposed
    w_comb_a_ref,   # [2H, E]        attn_combine weight (attn part), pre-transposed
    b_comb_ref,     # [1, E]
    out_ref,        # [Bt, E]
):
    emb = emb_ref[...].astype(jnp.float32)
    hid = hid_ref[...].astype(jnp.float32)

    # attn(cat(emb, hid))[:, :S]  ==  emb @ W_e[:, :S] + hid @ W_h[:, :S] + b[:S]
    logits = (
        jnp.dot(emb, w_attn_e_ref[...], preferred_element_type=jnp.float32)
        + jnp.dot(hid, w_attn_h_ref[...], preferred_element_type=jnp.float32)
        + b_attn_ref[...]
    )                                                       # [Bt, S]

    # softmax over dim 1
    m = jnp.max(logits, axis=1, keepdims=True)
    p = jnp.exp(logits - m)
    denom = jnp.sum(p, axis=1, keepdims=True)
    attn_weights = p * pl.reciprocal(denom, approx=True)    # [Bt, S], EUP vrcp

    # bmm(attn_weights[:,None,:], enc.permute(1,0,2)).squeeze(1)  ==
    #   sum_s attn_weights[b, s] * enc[s, b, :]
    # Done on the VPU (broadcast mul + reduce over leading axis); only the tiny
    # [Bt, S] weight matrix is transposed (XLU), the big enc tensor is not.
    enc = enc_ref[...].astype(jnp.float32)                  # [S, Bt, 2H]
    w_sb = jnp.transpose(attn_weights)                      # [S, Bt]
    attn_applied = jnp.sum(w_sb[:, :, None] * enc, axis=0)  # [Bt, 2H]

    # attn_combine(cat(emb, attn_applied)) == emb @ W_ce + attn_applied @ W_ca + b
    out = (
        jnp.dot(emb, w_comb_e_ref[...], preferred_element_type=jnp.float32)
        + jnp.dot(attn_applied, w_comb_a_ref[...], preferred_element_type=jnp.float32)
        + b_comb_ref[...]
    )
    out_ref[...] = out.astype(out_ref.dtype)


def prepare_params(params, seq_len, embed_size):
    """One-time weight prep (hoisted out of the per-decode-step hot path).

    PyTorch Linear stores weight as [out, in]; we split along `in`, keep only the
    first `seq_len` output features of `attn`, and transpose to [in, out] so the
    kernel does plain row-major MXU matmuls.
    """
    E = embed_size
    w_attn = params["w_attn"]                       # [L, E+H]
    w_comb = params["w_comb"]                       # [E, E+2H]
    return {
        "w_attn_e": jnp.transpose(w_attn[:seq_len, :E]),            # [E, S]
        "w_attn_h": jnp.transpose(w_attn[:seq_len, E:]),            # [H, S]
        "b_attn": params["b_attn"][:seq_len].reshape(1, seq_len),   # [1, S]
        "w_comb_e": jnp.transpose(w_comb[:, :E]),                   # [E, E]
        "w_comb_a": jnp.transpose(w_comb[:, E:]),                   # [2H, E]
        "b_comb": params["b_comb"].reshape(1, E),                   # [1, E]
    }


def _pick_batch_tile(B):
    """Largest batch tile that divides B and satisfies the (8, 128) tiling rule."""
    if B % 8 != 0:
        return B                      # single full block (full-dim rule)
    tile = min(B, 256)
    while B % tile:
        tile -= 8
    return tile


def _const_spec(arr):
    """Full-array block, same block for every grid step (weight stays resident)."""
    nd = arr.ndim
    return pl.BlockSpec(arr.shape, lambda i, _nd=nd: (0,) * _nd)


def tutorial_attention(decoder_embeds, decoder_past_hidden, encoder_states, prepped,
                       *, batch_tile=None):
    """decoder_embeds: [1, B, E]; decoder_past_hidden: [1, B, H];
    encoder_states: [S, B, 2H] (native layout, NOT permuted);
    prepped: output of prepare_params().  Returns [1, B, E]."""
    emb = decoder_embeds[0]                         # [B, E]
    hid = decoder_past_hidden[0]                    # [B, H]
    enc = encoder_states                            # [S, B, 2H] -- no transpose

    S, B, ENC_H = enc.shape
    E = emb.shape[1]
    H = hid.shape[1]

    if batch_tile is None:
        batch_tile = _pick_batch_tile(B)
    assert B % batch_tile == 0, "batch_tile must divide B"
    grid = (B // batch_tile,)

    in_specs = [
        pl.BlockSpec((batch_tile, E), lambda i: (i, 0)),
        pl.BlockSpec((batch_tile, H), lambda i: (i, 0)),
        pl.BlockSpec((S, batch_tile, ENC_H), lambda i: (0, i, 0)),
        _const_spec(prepped["w_attn_e"]),
        _const_spec(prepped["w_attn_h"]),
        _const_spec(prepped["b_attn"]),
        _const_spec(prepped["w_comb_e"]),
        _const_spec(prepped["w_comb_a"]),
        _const_spec(prepped["b_comb"]),
    ]
    out_spec = pl.BlockSpec((batch_tile, E), lambda i: (i, 0))
    # TODO(synk): for very large S*B_tile on v7x, also raise vmem_limit_bytes /
    # shrink batch_tile; at these shapes the defaults are ample.

    out = pl.pallas_call(
        tutorial_attention_kernel,
        out_shape=jax.ShapeDtypeStruct((B, E), jnp.float32),
        grid=grid,
        in_specs=in_specs,
        out_specs=out_spec,
        compiler_params=pltpu.CompilerParams(dimension_semantics=("parallel",)),
    )(
        emb, hid, enc,
        prepped["w_attn_e"], prepped["w_attn_h"], prepped["b_attn"],
        prepped["w_comb_e"], prepped["w_comb_a"], prepped["b_comb"],
    )

    return out[None, :, :]                          # [1, B, E]


def _reference(decoder_embeds, decoder_past_hidden, encoder_states, params):
    """Pure-JAX mirror of the PyTorch forward, for verification."""
    seq_len = encoder_states.shape[0]
    emb = decoder_embeds[0]
    hid = decoder_past_hidden[0]
    eh = jnp.concatenate([emb, hid], axis=1)
    logits = eh @ params["w_attn"].T + params["b_attn"]
    logits = logits[:, :seq_len]
    w = jax.nn.softmax(logits, axis=1)
    applied = jnp.einsum("bs,bsd->bd", w, jnp.transpose(encoder_states, (1, 0, 2)))
    cat = jnp.concatenate([emb, applied], axis=1)
    out = cat @ params["w_comb"].T + params["b_comb"]
    return out[None]


if __name__ == "__main__":
    # Small shapes consistent with the module:
    #   batch B=16 (tiled by 8 -> 2 grid steps), embedding E=32,
    #   decoder hidden H=32, encoder hidden = 2H = 64 (required by
    #   attn_combine input dim), max_length L=16, encoder seq_len S=8.
    B, E, H, L, S = 16, 32, 32, 16, 8
    ENC_H = 2 * H

    key = jax.random.PRNGKey(0)
    ks = jax.random.split(key, 7)

    decoder_embeds = jax.random.normal(ks[0], (1, B, E), dtype=jnp.float32)
    decoder_past_hidden = jax.random.normal(ks[1], (1, B, H), dtype=jnp.float32)
    encoder_states = jax.random.normal(ks[2], (S, B, ENC_H), dtype=jnp.float32)

    params = {
        "w_attn": 0.1 * jax.random.normal(ks[3], (L, E + H), dtype=jnp.float32),
        "b_attn": 0.1 * jax.random.normal(ks[4], (L,), dtype=jnp.float32),
        "w_comb": 0.1 * jax.random.normal(ks[5], (E, E + 2 * H), dtype=jnp.float32),
        "b_comb": 0.1 * jax.random.normal(ks[6], (E,), dtype=jnp.float32),
    }

    # One-time weight prep, outside the per-step hot path.
    prepped = jax.tree_util.tree_map(
        jax.block_until_ready, prepare_params(params, seq_len=S, embed_size=E)
    )

    out = tutorial_attention(decoder_embeds, decoder_past_hidden, encoder_states,
                             prepped, batch_tile=8)
    out = jax.block_until_ready(out)

    ref = _reference(decoder_embeds, decoder_past_hidden, encoder_states, params)
    # Tolerance loosened from 1e-5 to cover the EUP approx reciprocal in softmax.
    np.testing.assert_allclose(np.asarray(out), np.asarray(ref), rtol=5e-3, atol=5e-3)

    assert out.shape == (1, B, E)
    print("KERNEL_OK")
</pallas_src>

<mosaic_0001>
module attributes {stable_mosaic.version = 11 : i64} {
  func.func @tutorial_attention_kernel(%arg0: i32, %arg1: memref<8x32xf32, #tpu.memory_space<vmem>>, %arg2: memref<8x32xf32, #tpu.memory_space<vmem>>, %arg3: memref<8x8x64xf32, #tpu.memory_space<vmem>>, %arg4: memref<32x8xf32, #tpu.memory_space<vmem>>, %arg5: memref<32x8xf32, #tpu.memory_space<vmem>>, %arg6: memref<1x8xf32, #tpu.memory_space<vmem>>, %arg7: memref<32x32xf32, #tpu.memory_space<vmem>>, %arg8: memref<64x32xf32, #tpu.memory_space<vmem>>, %arg9: memref<1x32xf32, #tpu.memory_space<vmem>>, %arg10: memref<8x32xf32, #tpu.memory_space<vmem>>) attributes {dimension_semantics = [#tpu.dimension_semantics<parallel>], iteration_bounds = array<i64: 2>, scalar_prefetch = 0 : i64, scratch_operands = 0 : i64, tpu.core_type = #tpu.core_type<tc>, window_params = [{transform_indices = @transform_0, window_bounds = array<i64: 8, 32>}, {transform_indices = @transform_1, window_bounds = array<i64: 8, 32>}, {transform_indices = @transform_2, window_bounds = array<i64: 8, 8, 64>}, {pipeline_mode = #tpu.pipeline_mode<synchronous>, transform_indices = @transform_3, window_bounds = array<i64: 32, 8>}, {pipeline_mode = #tpu.pipeline_mode<synchronous>, transform_indices = @transform_4, window_bounds = array<i64: 32, 8>}, {pipeline_mode = #tpu.pipeline_mode<synchronous>, transform_indices = @transform_5, window_bounds = array<i64: 1, 8>}, {pipeline_mode = #tpu.pipeline_mode<synchronous>, transform_indices = @transform_6, window_bounds = array<i64: 32, 32>}, {pipeline_mode = #tpu.pipeline_mode<synchronous>, transform_indices = @transform_7, window_bounds = array<i64: 64, 32>}, {pipeline_mode = #tpu.pipeline_mode<synchronous>, transform_indices = @transform_8, window_bounds = array<i64: 1, 32>}, {transform_indices = @transform_9, window_bounds = array<i64: 8, 32>}]} {
    %c0 = arith.constant 0 : index
    %c0_0 = arith.constant 0 : index
    %0 = vector.load %arg1[%c0, %c0_0] : memref<8x32xf32, #tpu.memory_space<vmem>>, vector<8x32xf32>
    %c0_1 = arith.constant 0 : index
    %c0_2 = arith.constant 0 : index
    %1 = vector.load %arg2[%c0_1, %c0_2] : memref<8x32xf32, #tpu.memory_space<vmem>>, vector<8x32xf32>
    %c0_3 = arith.constant 0 : index
    %c0_4 = arith.constant 0 : index
    %2 = vector.load %arg4[%c0_3, %c0_4] : memref<32x8xf32, #tpu.memory_space<vmem>>, vector<32x8xf32>
    %cst = arith.constant dense<0.000000e+00> : vector<8x8xf32>
    %3 = tpu.matmul %0, %2, %cst {dimension_numbers = #tpu.dot_dimension_numbers<[1], [0], [0], [1], [0, 0, 1, 1], [], []>} : vector<8x32xf32>, vector<32x8xf32>, vector<8x8xf32> -> vector<8x8xf32>
    %c0_5 = arith.constant 0 : index
    %c0_6 = arith.constant 0 : index
    %4 = vector.load %arg5[%c0_5, %c0_6] : memref<32x8xf32, #tpu.memory_space<vmem>>, vector<32x8xf32>
    %cst_7 = arith.constant dense<0.000000e+00> : vector<8x8xf32>
    %5 = tpu.matmul %1, %4, %cst_7 {dimension_numbers = #tpu.dot_dimension_numbers<[1], [0], [0], [1], [0, 0, 1, 1], [], []>} : vector<8x32xf32>, vector<32x8xf32>, vector<8x8xf32> -> vector<8x8xf32>
    %6 = arith.addf %3, %5 : vector<8x8xf32>
    %c0_8 = arith.constant 0 : index
    %c0_9 = arith.constant 0 : index
    %7 = vector.load %arg6[%c0_8, %c0_9] : memref<1x8xf32, #tpu.memory_space<vmem>>, vector<1x8xf32>
    %8 = vector.broadcast %7 : vector<1x8xf32> to vector<8x8xf32>
    %9 = arith.addf %6, %8 : vector<8x8xf32>
    %cst_10 = arith.constant dense<0xFF800000> : vector<8xf32>
    %10 = vector.multi_reduction <maximumf>, %9, %cst_10 [1] : vector<8x8xf32> to vector<8xf32>
    %11 = vector.shape_cast %10 : vector<8xf32> to vector<8x1xf32>
    %12 = vector.broadcast %11 : vector<8x1xf32> to vector<8x8xf32>
    %13 = arith.subf %9, %12 : vector<8x8xf32>
    %14 = math.exp %13 : vector<8x8xf32>
    %cst_11 = arith.constant dense<0.000000e+00> : vector<8xf32>
    %15 = vector.multi_reduction <add>, %14, %cst_11 [1] : vector<8x8xf32> to vector<8xf32>
    %16 = vector.shape_cast %15 : vector<8xf32> to vector<8x1xf32>
    %17 = tpu.reciprocal %16 {approx = true} : vector<8x1xf32> -> vector<8x1xf32>
    %18 = vector.broadcast %17 : vector<8x1xf32> to vector<8x8xf32>
    %19 = arith.mulf %14, %18 : vector<8x8xf32>
    %c0_12 = arith.constant 0 : index
    %c0_13 = arith.constant 0 : index
    %c0_14 = arith.constant 0 : index
    %20 = vector.load %arg3[%c0_12, %c0_13, %c0_14] : memref<8x8x64xf32, #tpu.memory_space<vmem>>, vector<8x8x64xf32>
    %21 = tpu.transpose %19, [1, 0] : vector<8x8xf32> -> vector<8x8xf32>
    %22 = vector.shape_cast %21 : vector<8x8xf32> to vector<8x8x1xf32>
    %23 = vector.broadcast %22 : vector<8x8x1xf32> to vector<8x8x64xf32>
    %24 = arith.mulf %23, %20 : vector<8x8x64xf32>
    %cst_15 = arith.constant dense<0.000000e+00> : vector<8x64xf32>
    %25 = vector.multi_reduction <add>, %24, %cst_15 [0] : vector<8x8x64xf32> to vector<8x64xf32>
    %c0_16 = arith.constant 0 : index
    %c0_17 = arith.constant 0 : index
    %26 = vector.load %arg7[%c0_16, %c0_17] : memref<32x32xf32, #tpu.memory_space<vmem>>, vector<32x32xf32>
    %cst_18 = arith.constant dense<0.000000e+00> : vector<8x32xf32>
    %27 = tpu.matmul %0, %26, %cst_18 {dimension_numbers = #tpu.dot_dimension_numbers<[1], [0], [0], [1], [0, 0, 1, 1], [], []>} : vector<8x32xf32>, vector<32x32xf32>, vector<8x32xf32> -> vector<8x32xf32>
    %c0_19 = arith.constant 0 : index
    %c0_20 = arith.constant 0 : index
    %28 = vector.load %arg8[%c0_19, %c0_20] : memref<64x32xf32, #tpu.memory_space<vmem>>, vector<64x32xf32>
    %cst_21 = arith.constant dense<0.000000e+00> : vector<8x32xf32>
    %29 = tpu.matmul %25, %28, %cst_21 {dimension_numbers = #tpu.dot_dimension_numbers<[1], [0], [0], [1], [0, 0, 1, 1], [], []>} : vector<8x64xf32>, vector<64x32xf32>, vector<8x32xf32> -> vector<8x32xf32>
    %30 = arith.addf %27, %29 : vector<8x32xf32>
    %c0_22 = arith.constant 0 : index
    %c0_23 = arith.constant 0 : index
    %31 = vector.load %arg9[%c0_22, %c0_23] : memref<1x32xf32, #tpu.memory_space<vmem>>, vector<1x32xf32>
    %32 = vector.broadcast %31 : vector<1x32xf32> to vector<8x32xf32>
    %33 = arith.addf %30, %32 : vector<8x32xf32>
    %c0_24 = arith.constant 0 : index
    %c0_25 = arith.constant 0 : index
    %34 = vector.load %arg10[%c0_24, %c0_25] : memref<8x32xf32, #tpu.memory_space<vmem>>, vector<8x32xf32>
    tpu.vector_store %arg10[%c0_24, %c0_25], %33 {strides = array<i32>} : memref<8x32xf32, #tpu.memory_space<vmem>>, vector<8x32xf32>,
    return
  }
  func.func @transform_0(%arg0: i32) -> (i32, i32) {
    %c0_i32 = arith.constant 0 : i32
    %c0_i32_0 = arith.constant 0 : i32
    return %arg0, %c0_i32 : i32, i32
  }
  func.func @transform_1(%arg0: i32) -> (i32, i32) {
    %c0_i32 = arith.constant 0 : i32
    %c0_i32_0 = arith.constant 0 : i32
    return %arg0, %c0_i32 : i32, i32
  }
  func.func @transform_2(%arg0: i32) -> (i32, i32, i32) {
    %c0_i32 = arith.constant 0 : i32
    %c0_i32_0 = arith.constant 0 : i32
    %c0_i32_1 = arith.constant 0 : i32
    return %c0_i32, %arg0, %c0_i32_0 : i32, i32, i32
  }
  func.func @transform_3(%arg0: i32) -> (i32, i32) {
    %c0_i32 = arith.constant 0 : i32
    %c0_i32_0 = arith.constant 0 : i32
    %c0_i32_1 = arith.constant 0 : i32
    return %c0_i32, %c0_i32_0 : i32, i32
  }
  func.func @transform_4(%arg0: i32) -> (i32, i32) {
    %c0_i32 = arith.constant 0 : i32
    %c0_i32_0 = arith.constant 0 : i32
    %c0_i32_1 = arith.constant 0 : i32
    return %c0_i32, %c0_i32_0 : i32, i32
  }
  func.func @transform_5(%arg0: i32) -> (i32, i32) {
    %c0_i32 = arith.constant 0 : i32
    %c0_i32_0 = arith.constant 0 : i32
    %c0_i32_1 = arith.constant 0 : i32
    return %c0_i32, %c0_i32_0 : i32, i32
  }
  func.func @transform_6(%arg0: i32) -> (i32, i32) {
    %c0_i32 = arith.constant 0 : i32
    %c0_i32_0 = arith.constant 0 : i32
    %c0_i32_1 = arith.constant 0 : i32
    return %c0_i32, %c0_i32_0 : i32, i32
  }
  func.func @transform_7(%arg0: i32) -> (i32, i32) {
    %c0_i32 = arith.constant 0 : i32
    %c0_i32_0 = arith.constant 0 : i32
    %c0_i32_1 = arith.constant 0 : i32
    return %c0_i32, %c0_i32_0 : i32, i32
  }
  func.func @transform_8(%arg0: i32) -> (i32, i32) {
    %c0_i32 = arith.constant 0 : i32
    %c0_i32_0 = arith.constant 0 : i32
    %c0_i32_1 = arith.constant 0 : i32
    return %c0_i32, %c0_i32_0 : i32, i32
  }
  func.func @transform_9(%arg0: i32) -> (i32, i32) {
    %c0_i32 = arith.constant 0 : i32
    %c0_i32_0 = arith.constant 0 : i32
    return %arg0, %c0_i32 : i32, i32
  }
}

</mosaic_0001>

<llo_original>
// kernel: tpu_custom_call.1
$region0: #{tpu_custom_call.1}
  #allocation0 [shape = 'u32[]', space=smem, size = 0x4, offset = 0x4, fixed_abs, tag = 'smem constant byte address 0x4 - core index']
  #allocation1 [shape = 'u32[144,128]{1,0:T(1,128)}', space=vmem, size = 0x12000, scoped, tag = 'internal scratch']
  %s0 = inlined_call_operand.hbm [shape: f32[16,32], index: 0, kind: input, shape index: {}]
  %s1 = inlined_call_operand.hbm [shape: f32[16,32], index: 1, kind: input, shape index: {}]
  %s2 = inlined_call_operand.vmem [shape: f32[8,16,64], index: 2, kind: input, shape index: {}]
  %s3 = inlined_call_operand.vmem [shape: f32[32,8], index: 3, kind: input, shape index: {}]
  %s4 = inlined_call_operand.vmem [shape: f32[32,8], index: 4, kind: input, shape index: {}]
  %s5 = inlined_call_operand.vmem [shape: f32[1,8], index: 5, kind: input, shape index: {}]
  %s6 = inlined_call_operand.vmem [shape: f32[32,32], index: 6, kind: input, shape index: {}]
  %s7 = inlined_call_operand.vmem [shape: f32[64,32], index: 7, kind: input, shape index: {}]
  %s8 = inlined_call_operand.vmem [shape: f32[1,32], index: 8, kind: input, shape index: {}]
  %s9 = inlined_call_operand.hbm [shape: f32[16,32], index: 9, kind: output, shape index: {}]
  %s10 = sld [smem:[#allocation0]]
  $region115: #{tpu_custom_call.1} parent=0
    _
  %s12 = ssub.s32 1, %s10
  %s13 = scalar_select 0, %s12, %s10
  $region1: #{tpu_custom_call.1} parent=0
    #allocation2 [shape = 'u8[8192]{0}', space=vmem, size = 0x2000, scoped, tag = 'input window, operand 0']
    #allocation3 [shape = 's32[2]{0}', space=sflag, size = 0x8, scoped, tag = 'scoped memory for tpu_custom_call.1']
    #allocation4 [shape = 's32[2]{0}', space=sflag, size = 0x8, scoped, tag = 'scoped memory for tpu_custom_call.1']
    #allocation5 [shape = 'u8[8192]{0}', space=vmem, size = 0x2000, scoped, tag = 'input window, operand 1']
    #allocation6 [shape = 's32[2]{0}', space=sflag, size = 0x8, scoped, tag = 'scoped memory for tpu_custom_call.1']
    #allocation7 [shape = 'u8[65536]{0}', space=vmem, size = 0x10000, scoped, tag = 'input window, operand 2']
    #allocation8 [shape = 'u8[8192]{0}', space=vmem, size = 0x2000, scoped, tag = 'output window, operand 0']
    %14 = vsyncpa [#allocation3], 0
    %s15 = scalar_lea.sflag [#allocation3], 1
    %16 = vsyncpa %s15, 0
    %17 = vsyncpa [#allocation6], 0
    %s18 = scalar_lea.sflag [#allocation6], 1
    %19 = vsyncpa %s18, 0
    %20 = vsyncpa [#allocation4], 0
    %s21 = scalar_lea.sflag [#allocation4], 1
    %22 = vsyncpa %s21, 0
    loop: start=0, step=1, limit=4
    $region2: #{tpu_custom_call.1} parent=1 // loop_pre_header
      _
    $region3: #{tpu_custom_call.1} parent=1 // loop_header
      %s24 = sphi 0, %s28
      %p25 = scmp.ge.s32.totalorder %s24, 4
      %s34 = sphi 0, %s36
      %s37 = sphi 0, %s34
      %s38 = sphi 0, %s37
      %s54 = sphi 0, %s38
      %s60 = sphi 0, %s62
      %s63 = sphi 0, %s60
      %s64 = sphi 0, %s63
      %s80 = sphi 0, %s64
      %s86 = sphi 0, %s88
      %s89 = sphi 0, %s86
      %s90 = sphi 0, %s89
      %s106 = sphi 0, %s90
      %s110 = sphi 0, %s110
      %s112 = sphi 0, %s110
      %s113 = sphi 0, %s112
      %s127 = sphi 0, %s113
      %s131 = sphi 0, %s131
      %s133 = sphi 0, %s131
      %s134 = sphi 0, %s133
      %s148 = sphi 0, %s134
      %s152 = sphi 0, %s152
      %s154 = sphi 0, %s152
      %s155 = sphi 0, %s154
      %s169 = sphi 0, %s155
      %s173 = sphi 0, %s173
      %s175 = sphi 0, %s173
      %s176 = sphi 0, %s175
      %s190 = sphi 0, %s176
      %s194 = sphi 0, %s194
      %s196 = sphi 0, %s194
      %s197 = sphi 0, %s196
      %s211 = sphi 0, %s197
      %s215 = sphi 0, %s215
      %s217 = sphi 0, %s215
      %s218 = sphi 0, %s217
      %s232 = sphi 0, %s218
      %s238 = sphi 0, %s240
      %s241 = sphi 0, %s238
      %s242 = sphi 0, %s241
      %s258 = sphi 0, %s242
    $region4: #{tpu_custom_call.1} parent=1 // loop_header_branch
      %27 = sbr.rel (%p25) target = $region8
    $region5: #{tpu_custom_call.1} parent=1 // loop_body
      %s29 = ssub.s32 %s24, 1
      %s30 = ssub.s32 %s24, 2
      %s31 = sadd.s32 %s24, 1
      %s32 = ssub.s32 %s24, %s31
      %p33 = scmp.eq.s32.totalorder %s32, 0
      %s35 = sadd.s32 %s34, 1
      %s36 = scalar_select %p33, %s34, %s35
      %p39 = pneg %p33
      %p40 = scmp.eq.s32.totalorder %s24, 1
      %p41 = por %p39, %p40
      %p42 = scmp.ne.s32.totalorder %s34, %s37
      %p43 = scmp.eq.s32.totalorder %s24, 0
      %p44 = por %p42, %p43
      %p45 = scmp.ne.s32.totalorder %s34, %s37
      %p46 = scmp.eq.s32.totalorder %s29, 1
      %p47 = por %p45, %p46
      %p48 = scmp.ne.s32.totalorder %s37, %s38
      %p49 = scmp.eq.s32.totalorder %s29, 0
      %p50 = por %p48, %p49
      %p51 = scmp.ne.s32.totalorder %s37, %s38
      %p52 = scmp.eq.s32.totalorder %s30, 1
      %p53 = por %p51, %p52
      %p55 = scmp.ne.s32.totalorder %s38, %s54
      %p56 = scmp.eq.s32.totalorder %s30, 0
      %p57 = por %p55, %p56
      %s58 = ssub.s32 %s24, %s31
      %p59 = scmp.eq.s32.totalorder %s58, 0
      %s61 = sadd.s32 %s60, 1
      %s62 = scalar_select %p59, %s60, %s61
      %p65 = pneg %p59
      %p66 = scmp.eq.s32.totalorder %s24, 1
      %p67 = por %p65, %p66
      %p68 = scmp.ne.s32.totalorder %s60, %s63
      %p69 = scmp.eq.s32.totalorder %s24, 0
      %p70 = por %p68, %p69
      %p71 = scmp.ne.s32.totalorder %s60, %s63
      %p72 = scmp.eq.s32.totalorder %s29, 1
      %p73 = por %p71, %p72
      %p74 = scmp.ne.s32.totalorder %s63, %s64
      %p75 = scmp.eq.s32.totalorder %s29, 0
      %p76 = por %p74, %p75
      %p77 = scmp.ne.s32.totalorder %s63, %s64
      %p78 = scmp.eq.s32.totalorder %s30, 1
      %p79 = por %p77, %p78
      %p81 = scmp.ne.s32.totalorder %s64, %s80
      %p82 = scmp.eq.s32.totalorder %s30, 0
      %p83 = por %p81, %p82
      %s84 = ssub.s32 %s24, %s31
      %p85 = scmp.eq.s32.totalorder %s84, 0
      %s87 = sadd.s32 %s86, 1
      %s88 = scalar_select %p85, %s86, %s87
      %p91 = pneg %p85
      %p92 = scmp.eq.s32.totalorder %s24, 1
      %p93 = por %p91, %p92
      %p94 = scmp.ne.s32.totalorder %s86, %s89
      %p95 = scmp.eq.s32.totalorder %s24, 0
      %p96 = por %p94, %p95
      %p97 = scmp.ne.s32.totalorder %s86, %s89
      %p98 = scmp.eq.s32.totalorder %s29, 1
      %p99 = por %p97, %p98
      %p100 = scmp.ne.s32.totalorder %s89, %s90
      %p101 = scmp.eq.s32.totalorder %s29, 0
      %p102 = por %p100, %p101
      %p103 = scmp.ne.s32.totalorder %s89, %s90
      %p104 = scmp.eq.s32.totalorder %s30, 1
      %p105 = por %p103, %p104
      %p107 = scmp.ne.s32.totalorder %s90, %s106
      %p108 = scmp.eq.s32.totalorder %s30, 0
      %p109 = por %p107, %p108
      %s111 = sadd.s32 %s110, 1
      %p114 = scmp.eq.s32.totalorder %s24, 1
      %p115 = scmp.ne.s32.totalorder %s110, %s112
      %p116 = scmp.eq.s32.totalorder %s24, 0
      %p117 = por %p115, %p116
      %p118 = scmp.ne.s32.totalorder %s110, %s112
      %p119 = scmp.eq.s32.totalorder %s29, 1
      %p120 = por %p118, %p119
      %p121 = scmp.ne.s32.totalorder %s112, %s113
      %p122 = scmp.eq.s32.totalorder %s29, 0
      %p123 = por %p121, %p122
      %p124 = scmp.ne.s32.totalorder %s112, %s113
      %p125 = scmp.eq.s32.totalorder %s30, 1
      %p126 = por %p124, %p125
      %p128 = scmp.ne.s32.totalorder %s113, %s127
      %p129 = scmp.eq.s32.totalorder %s30, 0
      %p130 = por %p128, %p129
      %s132 = sadd.s32 %s131, 1
      %p135 = scmp.eq.s32.totalorder %s24, 1
      %p136 = scmp.ne.s32.totalorder %s131, %s133
      %p137 = scmp.eq.s32.totalorder %s24, 0
      %p138 = por %p136, %p137
      %p139 = scmp.ne.s32.totalorder %s131, %s133
      %p140 = scmp.eq.s32.totalorder %s29, 1
      %p141 = por %p139, %p140
      %p142 = scmp.ne.s32.totalorder %s133, %s134
      %p143 = scmp.eq.s32.totalorder %s29, 0
      %p144 = por %p142, %p143
      %p145 = scmp.ne.s32.totalorder %s133, %s134
      %p146 = scmp.eq.s32.totalorder %s30, 1
      %p147 = por %p145, %p146
      %p149 = scmp.ne.s32.totalorder %s134, %s148
      %p150 = scmp.eq.s32.totalorder %s30, 0
      %p151 = por %p149, %p150
      %s153 = sadd.s32 %s152, 1
      %p156 = scmp.eq.s32.totalorder %s24, 1
      %p157 = scmp.ne.s32.totalorder %s152, %s154
      %p158 = scmp.eq.s32.totalorder %s24, 0
      %p159 = por %p157, %p158
      %p160 = scmp.ne.s32.totalorder %s152, %s154
      %p161 = scmp.eq.s32.totalorder %s29, 1
      %p162 = por %p160, %p161
      %p163 = scmp.ne.s32.totalorder %s154, %s155
      %p164 = scmp.eq.s32.totalorder %s29, 0
      %p165 = por %p163, %p164
      %p166 = scmp.ne.s32.totalorder %s154, %s155
      %p167 = scmp.eq.s32.totalorder %s30, 1
      %p168 = por %p166, %p167
      %p170 = scmp.ne.s32.totalorder %s155, %s169
      %p171 = scmp.eq.s32.totalorder %s30, 0
      %p172 = por %p170, %p171
      %s174 = sadd.s32 %s173, 1
      %p177 = scmp.eq.s32.totalorder %s24, 1
      %p178 = scmp.ne.s32.totalorder %s173, %s175
      %p179 = scmp.eq.s32.totalorder %s24, 0
      %p180 = por %p178, %p179
      %p181 = scmp.ne.s32.totalorder %s173, %s175
      %p182 = scmp.eq.s32.totalorder %s29, 1
      %p183 = por %p181, %p182
      %p184 = scmp.ne.s32.totalorder %s175, %s176
      %p185 = scmp.eq.s32.totalorder %s29, 0
      %p186 = por %p184, %p185
      %p187 = scmp.ne.s32.totalorder %s175, %s176
      %p188 = scmp.eq.s32.totalorder %s30, 1
      %p189 = por %p187, %p188
      %p191 = scmp.ne.s32.totalorder %s176, %s190
      %p192 = scmp.eq.s32.totalorder %s30, 0
      %p193 = por %p191, %p192
      %s195 = sadd.s32 %s194, 1
      %p198 = scmp.eq.s32.totalorder %s24, 1
      %p199 = scmp.ne.s32.totalorder %s194, %s196
      %p200 = scmp.eq.s32.totalorder %s24, 0
      %p201 = por %p199, %p200
      %p202 = scmp.ne.s32.totalorder %s194, %s196
      %p203 = scmp.eq.s32.totalorder %s29, 1
      %p204 = por %p202, %p203
      %p205 = scmp.ne.s32.totalorder %s196, %s197
      %p206 = scmp.eq.s32.totalorder %s29, 0
      %p207 = por %p205, %p206
      %p208 = scmp.ne.s32.totalorder %s196, %s197
      %p209 = scmp.eq.s32.totalorder %s30, 1
      %p210 = por %p208, %p209
      %p212 = scmp.ne.s32.totalorder %s197, %s211
      %p213 = scmp.eq.s32.totalorder %s30, 0
      %p214 = por %p212, %p213
      %s216 = sadd.s32 %s215, 1
      %p219 = scmp.eq.s32.totalorder %s24, 1
      %p220 = scmp.ne.s32.totalorder %s215, %s217
      %p221 = scmp.eq.s32.totalorder %s24, 0
      %p222 = por %p220, %p221
      %p223 = scmp.ne.s32.totalorder %s215, %s217
      %p224 = scmp.eq.s32.totalorder %s29, 1
      %p225 = por %p223, %p224
      %p226 = scmp.ne.s32.totalorder %s217, %s218
      %p227 = scmp.eq.s32.totalorder %s29, 0
      %p228 = por %p226, %p227
      %p229 = scmp.ne.s32.totalorder %s217, %s218
      %p230 = scmp.eq.s32.totalorder %s30, 1
      %p231 = por %p229, %p230
      %p233 = scmp.ne.s32.totalorder %s218, %s232
      %p234 = scmp.eq.s32.totalorder %s30, 0
      %p235 = por %p233, %p234
      %s236 = ssub.s32 %s24, %s31
      %p237 = scmp.eq.s32.totalorder %s236, 0
      %s239 = sadd.s32 %s238, 1
      %s240 = scalar_select %p237, %s238, %s239
      %p243 = pneg %p237
      %p244 = scmp.eq.s32.totalorder %s24, 1
      %p245 = por %p243, %p244
      %p246 = scmp.ne.s32.totalorder %s238, %s241
      %p247 = scmp.eq.s32.totalorder %s24, 0
      %p248 = por %p246, %p247
      %p249 = scmp.ne.s32.totalorder %s238, %s241
      %p250 = scmp.eq.s32.totalorder %s29, 1
      %p251 = por %p249, %p250
      %p252 = scmp.ne.s32.totalorder %s241, %s242
      %p253 = scmp.eq.s32.totalorder %s29, 0
      %p254 = por %p252, %p253
      %p255 = scmp.ne.s32.totalorder %s241, %s242
      %p256 = scmp.eq.s32.totalorder %s30, 1
      %p257 = por %p255, %p256
      %p259 = scmp.ne.s32.totalorder %s242, %s258
      %p260 = scmp.eq.s32.totalorder %s30, 0
      %p261 = por %p259, %p260
      %p262 = scmp.le.s32.totalorder 1, %s24
      %p263 = scmp.lt.s32.totalorder %s24, 3
      %p264 = pnand %p262, %p263
      %p265 = pneg %p264
      // Predicated region
      $region9: #{tpu_custom_call.1} parent=5 // pred_check
        _
      $region10: #{tpu_custom_call.1} parent=5 // pred_check_branch
        %267 = sbr.rel (%p264) target = $region12
      $region11: #{tpu_custom_call.1} parent=5 // pred_region
        %s268 = ssub.s32 %s24, 1
        // Predicated region
        $region13: #{tpu_custom_call.1} parent=11 // pred_check
          %p269 = pneg %p123
        $region14: #{tpu_custom_call.1} parent=11 // pred_check_branch
          %271 = sbr.rel (%p269) target = $region16
        $region15: #{tpu_custom_call.1} parent=11 // pred_region
          _
        $region16: #{tpu_custom_call.1} parent=11 // pred_fallthru
          _
        // Predicated region
        $region17: #{tpu_custom_call.1} parent=11 // pred_check
          %p272 = pneg %p144
        $region18: #{tpu_custom_call.1} parent=11 // pred_check_branch
          %274 = sbr.rel (%p272) target = $region20
        $region19: #{tpu_custom_call.1} parent=11 // pred_region
          _
        $region20: #{tpu_custom_call.1} parent=11 // pred_fallthru
          _
        // Predicated region
        $region21: #{tpu_custom_call.1} parent=11 // pred_check
          %p275 = pneg %p165
        $region22: #{tpu_custom_call.1} parent=11 // pred_check_branch
          %277 = sbr.rel (%p275) target = $region24
        $region23: #{tpu_custom_call.1} parent=11 // pred_region
          _
        $region24: #{tpu_custom_call.1} parent=11 // pred_fallthru
          _
        // Predicated region
        $region25: #{tpu_custom_call.1} parent=11 // pred_check
          %p278 = pneg %p186
        $region26: #{tpu_custom_call.1} parent=11 // pred_check_branch
          %280 = sbr.rel (%p278) target = $region28
        $region27: #{tpu_custom_call.1} parent=11 // pred_region
          _
        $region28: #{tpu_custom_call.1} parent=11 // pred_fallthru
          _
        // Predicated region
        $region29: #{tpu_custom_call.1} parent=11 // pred_check
          %p281 = pneg %p207
        $region30: #{tpu_custom_call.1} parent=11 // pred_check_branch
          %283 = sbr.rel (%p281) target = $region32
        $region31: #{tpu_custom_call.1} parent=11 // pred_region
          _
        $region32: #{tpu_custom_call.1} parent=11 // pred_fallthru
          _
        // Predicated region
        $region33: #{tpu_custom_call.1} parent=11 // pred_check
          %p284 = pneg %p228
        $region34: #{tpu_custom_call.1} parent=11 // pred_check_branch
          %286 = sbr.rel (%p284) target = $region36
        $region35: #{tpu_custom_call.1} parent=11 // pred_region
          _
        $region36: #{tpu_custom_call.1} parent=11 // pred_fallthru
          _
      $region12: #{tpu_custom_call.1} parent=5 // pred_fallthru
        _
      %p287 = scmp.lt.s32.totalorder %s24, 2
      // Predicated region
      $region37: #{tpu_custom_call.1} parent=5 // pred_check
        %p288 = pneg %p287
      $region38: #{tpu_custom_call.1} parent=5 // pred_check_branch
        %290 = sbr.rel (%p288) target = $region40
      $region39: #{tpu_custom_call.1} parent=5 // pred_region
        // Predicated region
        $region41: #{tpu_custom_call.1} parent=39 // pred_check
          %p291 = pneg %p44
        $region42: #{tpu_custom_call.1} parent=39 // pred_check_branch
          %293 = sbr.rel (%p291) target = $region44
        $region43: #{tpu_custom_call.1} parent=39 // pred_region
          %s294 = sand.u32 %s34, 1
          %s295 = scalar_lea.sflag [#allocation3], %s294
          %s296 = sand.u32 %s34, 1
          %s297 = smul.addr %s296, 8
          %s298 = scalar_lea.vmem [#allocation2], %s297
          %s300 = ssub.s32 128, 128
          %301 = vsyncadd %s295, %s300
          %s302 = smul.addr %s24, 128
          %s303 = scalar_lea.hbm %s0, %s302
          %s305 = sshll.u32 %s298, 4
          %s306 = int_to_ptr.vmem [resolvable:$true] %s305
          %308 = dma.hbm_to_vmem [thread:$0]  %s303, 128, %s306, %s295
        $region44: #{tpu_custom_call.1} parent=39 // pred_fallthru
          _
        // Predicated region
        $region45: #{tpu_custom_call.1} parent=39 // pred_check
          %p309 = pneg %p70
        $region46: #{tpu_custom_call.1} parent=39 // pred_check_branch
          %311 = sbr.rel (%p309) target = $region48
        $region47: #{tpu_custom_call.1} parent=39 // pred_region
          %s312 = sand.u32 %s60, 1
          %s313 = scalar_lea.sflag [#allocation6], %s312
          %s314 = sand.u32 %s60, 1
          %s315 = smul.addr %s314, 8
          %s316 = scalar_lea.vmem [#allocation5], %s315
          %s318 = ssub.s32 128, 128
          %319 = vsyncadd %s313, %s318
          %s320 = smul.addr %s24, 128
          %s321 = scalar_lea.hbm %s1, %s320
          %s323 = sshll.u32 %s316, 4
          %s324 = int_to_ptr.vmem [resolvable:$true] %s323
          %326 = dma.hbm_to_vmem [thread:$0]  %s321, 128, %s324, %s313
        $region48: #{tpu_custom_call.1} parent=39 // pred_fallthru
          _
        // Predicated region
        $region49: #{tpu_custom_call.1} parent=39 // pred_check
          %p327 = pneg %p96
        $region50: #{tpu_custom_call.1} parent=39 // pred_check_branch
          %329 = sbr.rel (%p327) target = $region52
        $region51: #{tpu_custom_call.1} parent=39 // pred_region
          %s330 = sand.u32 %s86, 1
          %s331 = sand.u32 %s86, 1
          %s332 = smul.addr %s331, 64
          %s333 = scalar_lea.vmem [#allocation7], %s332
          %s334 = smul.addr %s24, 8
          %s335 = scalar_lea.vmem %s2, %s334
          // Predicated region
          $region53: #{tpu_custom_call.1} parent=51 // pred_check
            _
          $region54: #{tpu_custom_call.1} parent=51 // pred_check_branch
            %337 = sbr.rel (0) target = $region56
          $region55: #{tpu_custom_call.1} parent=51 // pred_region
            // Predicated region
            $region57: #{tpu_custom_call.1} parent=55 // pred_check
              _
            $region58: #{tpu_custom_call.1} parent=55 // pred_check_branch
              %339 = sbr.rel (0) target = $region60
            $region59: #{tpu_custom_call.1} parent=55 // pred_region
              // Predicated region
              $region72: #{tpu_custom_call.1} parent=59 // pred_check
                _
              $region73: #{tpu_custom_call.1} parent=59 // pred_check_branch
                %368 = sbr.rel (0) target = $region75
              $region74: #{tpu_custom_call.1} parent=59 // pred_region
                loop: start=0, step=1, limit=1
                $region76: #{tpu_custom_call.1} parent=74 // loop_pre_header
                  _
                $region77: #{tpu_custom_call.1} parent=74 // loop_header
                  %s370 = sphi 0, %s374
                  %p371 = scmp.ge.s32.totalorder %s370, 1
                  %s375 = sphi %s335, %s335
                  %s376 = sphi %s333, %s333
                $region78: #{tpu_custom_call.1} parent=74 // loop_header_branch
                  %373 = sbr.rel (%p371) target = $region82
                $region79: #{tpu_custom_call.1} parent=74 // loop_body
                  %v377 = vld [vmem:[%s375] sm:$0xff]
                  %378 = vst [vmem:[%s376] sm:$0xff] %v377
                  %v379 = vld [vmem:[%s375 + $0x10] sm:$0xff]
                  %380 = vst [vmem:[%s376 + $0x8] sm:$0xff] %v379
                  %v381 = vld [vmem:[%s375 + $0x20] sm:$0xff]
                  %382 = vst [vmem:[%s376 + $0x10] sm:$0xff] %v381
                  %v383 = vld [vmem:[%s375 + $0x30] sm:$0xff]
                  %384 = vst [vmem:[%s376 + $0x18] sm:$0xff] %v383
                  %v385 = vld [vmem:[%s375 + $0x40] sm:$0xff]
                  %386 = vst [vmem:[%s376 + $0x20] sm:$0xff] %v385
                  %v387 = vld [vmem:[%s375 + $0x50] sm:$0xff]
                  %388 = vst [vmem:[%s376 + $0x28] sm:$0xff] %v387
                  %v389 = vld [vmem:[%s375 + $0x60] sm:$0xff]
                  %390 = vst [vmem:[%s376 + $0x30] sm:$0xff] %v389
                  %v391 = vld [vmem:[%s375 + $0x70] sm:$0xff]
                  %392 = vst [vmem:[%s376 + $0x38] sm:$0xff] %v391
                $region80: #{tpu_custom_call.1} parent=74 // loop_footer
                  %s374 = sadd.s32 1, %s370
                $region81: #{tpu_custom_call.1} parent=74 // loop_footer_branch
                  %369 = sbr.rel target = $region77
                $region82: #{tpu_custom_call.1} parent=74 // loop_exit
                  _
              $region75: #{tpu_custom_call.1} parent=59 // pred_fallthru
                _
              // Predicated region
              $region83: #{tpu_custom_call.1} parent=59 // pred_check
                _
              $region84: #{tpu_custom_call.1} parent=59 // pred_check_branch
                %394 = sbr.rel target = $region86
              $region85: #{tpu_custom_call.1} parent=59 // pred_region
                _
              $region86: #{tpu_custom_call.1} parent=59 // pred_fallthru
                _
            $region60: #{tpu_custom_call.1} parent=55 // pred_fallthru
              _
            // Predicated region
            $region61: #{tpu_custom_call.1} parent=55 // pred_check
              _
            $region62: #{tpu_custom_call.1} parent=55 // pred_check_branch
              %341 = sbr.rel target = $region64
            $region63: #{tpu_custom_call.1} parent=55 // pred_region
              loop: start=0, step=1, limit=1
              $region65: #{tpu_custom_call.1} parent=63 // loop_pre_header
                _
              $region66: #{tpu_custom_call.1} parent=63 // loop_header
                %s344 = sphi 0, %s348
                %p345 = scmp.ge.s32.totalorder %s344, 1
                %s349 = sphi %s335, %s335
                %s350 = sphi %s333, %s333
              $region67: #{tpu_custom_call.1} parent=63 // loop_header_branch
                %347 = sbr.rel (%p345) target = $region71
              $region68: #{tpu_custom_call.1} parent=63 // loop_body
                %v351 = vld [vmem:[%s349] sm:$0xff]
                %352 = vst [vmem:[%s350] sm:$0xff] %v351
                %v353 = vld [vmem:[%s349 + $0x10] sm:$0xff]
                %354 = vst [vmem:[%s350 + $0x8] sm:$0xff] %v353
                %v355 = vld [vmem:[%s349 + $0x20] sm:$0xff]
                %356 = vst [vmem:[%s350 + $0x10] sm:$0xff] %v355
                %v357 = vld [vmem:[%s349 + $0x30] sm:$0xff]
                %358 = vst [vmem:[%s350 + $0x18] sm:$0xff] %v357
                %v359 = vld [vmem:[%s349 + $0x40] sm:$0xff]
                %360 = vst [vmem:[%s350 + $0x20] sm:$0xff] %v359
                %v361 = vld [vmem:[%s349 + $0x50] sm:$0xff]
                %362 = vst [vmem:[%s350 + $0x28] sm:$0xff] %v361
                %v363 = vld [vmem:[%s349 + $0x60] sm:$0xff]
                %364 = vst [vmem:[%s350 + $0x30] sm:$0xff] %v363
                %v365 = vld [vmem:[%s349 + $0x70] sm:$0xff]
                %366 = vst [vmem:[%s350 + $0x38] sm:$0xff] %v365
              $region69: #{tpu_custom_call.1} parent=63 // loop_footer
                %s348 = sadd.s32 1, %s344
              $region70: #{tpu_custom_call.1} parent=63 // loop_footer_branch
                %343 = sbr.rel target = $region66
              $region71: #{tpu_custom_call.1} parent=63 // loop_exit
                _
            $region64: #{tpu_custom_call.1} parent=55 // pred_fallthru
              _
          $region56: #{tpu_custom_call.1} parent=51 // pred_fallthru
            _
          %395 = vnop
        $region52: #{tpu_custom_call.1} parent=39 // pred_fallthru
          _
      $region40: #{tpu_custom_call.1} parent=5 // pred_fallthru
        _
      %p396 = scmp.le.s32.totalorder 1, %s24
      %p397 = scmp.lt.s32.totalorder %s24, 3
      %p398 = pnand %p396, %p397
      %p399 = pneg %p398
      // Predicated region
      $region87: #{tpu_custom_call.1} parent=5 // pred_check
        _
      $region88: #{tpu_custom_call.1} parent=5 // pred_check_branch
        %401 = sbr.rel (%p398) target = $region90
      $region89: #{tpu_custom_call.1} parent=5 // pred_region
        %s402 = ssub.s32 %s24, 1
        %s403 = sand.u32 %s37, 1
        %s404 = scalar_lea.sflag [#allocation3], %s403
        %s405 = sand.u32 %s37, 1
        %s406 = smul.addr %s405, 8
        %s407 = scalar_lea.vmem [#allocation2], %s406
        // Predicated region
        $region91: #{tpu_custom_call.1} parent=89 // pred_check
          %p408 = pneg %p50
        $region92: #{tpu_custom_call.1} parent=89 // pred_check_branch
          %410 = sbr.rel (%p408) target = $region94
        $region93: #{tpu_custom_call.1} parent=89 // pred_region
          %411 = dma.done %s404, 128
        $region94: #{tpu_custom_call.1} parent=89 // pred_fallthru
          _
        %s412 = sand.u32 %s63, 1
        %s413 = scalar_lea.sflag [#allocation6], %s412
        %s414 = sand.u32 %s63, 1
        %s415 = smul.addr %s414, 8
        %s416 = scalar_lea.vmem [#allocation5], %s415
        // Predicated region
        $region95: #{tpu_custom_call.1} parent=89 // pred_check
          %p417 = pneg %p76
        $region96: #{tpu_custom_call.1} parent=89 // pred_check_branch
          %419 = sbr.rel (%p417) target = $region98
        $region97: #{tpu_custom_call.1} parent=89 // pred_region
          %420 = dma.done %s413, 128
        $region98: #{tpu_custom_call.1} parent=89 // pred_fallthru
          _
        %s421 = sand.u32 %s89, 1
        %s422 = sand.u32 %s89, 1
        %s423 = smul.addr %s422, 64
        %s424 = scalar_lea.vmem [#allocation7], %s423
        // Predicated region
        $region99: #{tpu_custom_call.1} parent=89 // pred_check
          %p425 = pneg %p102
        $region100: #{tpu_custom_call.1} parent=89 // pred_check_branch
          %427 = sbr.rel (%p425) target = $region102
        $region101: #{tpu_custom_call.1} parent=89 // pred_region
          _
        $region102: #{tpu_custom_call.1} parent=89 // pred_fallthru
          _
        %s428 = sand.u32 %s37, 1
        %s429 = scalar_lea.sflag [#allocation3], %s428
        %s430 = sand.u32 %s37, 1
        %s431 = smul.addr %s430, 8
        %s432 = scalar_lea.vmem [#allocation2], %s431
        %p433 = pneg %p50
        %p434 = pneg %p47
        %s435 = sand.u32 %s63, 1
        %s436 = scalar_lea.sflag [#allocation6], %s435
        %s437 = sand.u32 %s63, 1
        %s438 = smul.addr %s437, 8
        %s439 = scalar_lea.vmem [#allocation5], %s438
        %p440 = pneg %p76
        %p441 = pneg %p73
        %s442 = sand.u32 %s89, 1
        %s443 = sand.u32 %s89, 1
        %s444 = smul.addr %s443, 64
        %s445 = scalar_lea.vmem [#allocation7], %s444
        %p446 = pneg %p102
        %p447 = pneg %p99
        %p448 = pneg %p123
        %p449 = pneg %p120
        %p450 = pneg %p144
        %p451 = pneg %p141
        %p452 = pneg %p165
        %p453 = pneg %p162
        %p454 = pneg %p186
        %p455 = pneg %p183
        %p456 = pneg %p207
        %p457 = pneg %p204
        %p458 = pneg %p228
        %p459 = pneg %p225
        %p460 = pneg %p254
        %p461 = pneg %p251
        %s462 = sand.u32 %s241, 1
        %s463 = scalar_lea.sflag [#allocation4], %s462
        %s464 = sand.u32 %s241, 1
        %s465 = smul.addr %s464, 8
        %s466 = scalar_lea.vmem [#allocation8], %s465
        %v467 = vld [vmem:[%s407] sm:$0xff]
        %v468 = vld [vmem:[%s416] sm:$0xff]
        %v469 = vld [vmem:[%s3] sm:$0xff]
        %v470 = vld [vmem:[%s3 + $0x8] sm:$0xff]
        %v471 = vld [vmem:[%s3 + $0x10] sm:$0xff]
        %v472 = vld [vmem:[%s3 + $0x18] sm:$0xff]
        %v473 = vld [vmem:[%s4] sm:$0xff]
        %v474 = vld [vmem:[%s4 + $0x8] sm:$0xff]
        %v475 = vld [vmem:[%s4 + $0x10] sm:$0xff]
        %v476 = vld [vmem:[%s4 + $0x18] sm:$0xff]
        %vm477 = vcmask 261120
        %v479 = vsel %vm477, %v468, 0
        %481 = vmatprep.subr.mxu0 0.0
        %482 = vmatpush1.msra.mxu0 %v473
        %483 = vmatprep.subr.mxu0 0.0
        %484 = vmatpush1.msra.mxu0 %v474
        %485 = vmatprep.subr.mxu0 0.0
        %486 = vmatpush1.msra.mxu0 %v475
        %487 = vmatprep.subr.mxu0 0.0
        %488 = vmatpush1.msra.mxu0 %v476
        %489 = vmatprep.subr.mxu0 0.0
        %490 = vmatpush1.msra.mxu0 0.0
        %491 = vmatprep.subr.mxu0 0.0
        %492 = vmatpush1.msra.mxu0 0.0
        %493 = vmatprep.subr.mxu0 0.0
        %494 = vmatpush1.msra.mxu0 0.0
        %495 = vmatprep.subr.mxu0 0.0
        %496 = vmatpush1.msra.mxu0 0.0
        %497 = vmatprep.subr.mxu0 0.0
        %498 = vmatpush1.msra.mxu0 0.0
        %499 = vmatprep.subr.mxu0 0.0
        %500 = vmatpush1.msra.mxu0 0.0
        %501 = vmatprep.subr.mxu0 0.0
        %502 = vmatpush1.msra.mxu0 0.0
        %503 = vmatprep.subr.mxu0 0.0
        %504 = vmatpush1.msra.mxu0 0.0
        %505 = vmatprep.subr.mxu0 0.0
        %506 = vmatpush1.msra.mxu0 0.0
        %507 = vmatprep.subr.mxu0 0.0
        %508 = vmatpush1.msra.mxu0 0.0
        %509 = vmatprep.subr.mxu0 0.0
        %510 = vmatpush1.msra.mxu0 0.0
        %511 = vmatprep.subr.mxu0 0.0
        %512 = vmatpush1.msra.mxu0 0.0
        %513 = vmatprep.subr.mxu0 0.0
        %514 = vmatpush1.msra.mxu0 0.0
        %515 = vmatprep.subr.mxu0 0.0
        %516 = vmatpush1.msra.mxu0 0.0
        %517 = vmatprep.subr.mxu0 0.0
        %518 = vmatpush1.msra.mxu0 0.0
        %519 = vmatprep.subr.mxu0 0.0
        %520 = vmatpush1.msra.mxu0 0.0
        %521 = vmatprep.subr.mxu0 0.0
        %522 = vmatpush1.msra.mxu0 0.0
        %523 = vmatprep.subr.mxu0 0.0
        %524 = vmatpush1.msra.mxu0 0.0
        %525 = vmatprep.subr.mxu0 0.0
        %526 = vmatpush1.msra.mxu0 0.0
        %527 = vmatprep.subr.mxu0 0.0
        %528 = vmatpush1.msra.mxu0 0.0
        %529 = vmatprep.subr.mxu0 0.0
        %530 = vmatpush1.msra.mxu0 0.0
        %531 = vmatprep.subr.mxu0 0.0
        %532 = vmatpush1.msra.mxu0 0.0
        %533 = vmatprep.subr.mxu0 0.0
        %534 = vmatpush1.msra.mxu0 0.0
        %535 = vmatprep.subr.mxu0 0.0
        %536 = vmatpush1.msra.mxu0 0.0
        %537 = vmatprep.subr.mxu0 0.0
        %538 = vmatpush1.msra.mxu0 0.0
        %539 = vmatprep.subr.mxu0 0.0
        %540 = vmatpush1.msra.mxu0 0.0
        %541 = vmatprep.subr.mxu0 0.0
        %542 = vmatpush1.msra.mxu0 0.0
        %543 = vmatprep.subr.mxu0 0.0
        %544 = vmatpush1.msra.mxu0 0.0
        %545 = vmatprep.mubr.f32.mxu0 0.0
        %546 = vmatmul.mubr.f32.gmra.mrb[0].mxu0 %v479
        %v547 = vpop.f32.mrb[0].mxu0
        %v548 = vadd.f32 0.0, %v547
        %v549 = vpop.f32.mrb[0].mxu0
        %550 = vdwg.mxu0
        %v552 = vsel %vm477, %v467, 0
        %554 = vmatprep.subr.mxu0 0.0
        %555 = vmatpush1.msra.mxu0 %v469
        %556 = vmatprep.subr.mxu0 0.0
        %557 = vmatpush1.msra.mxu0 %v470
        %558 = vmatprep.subr.mxu0 0.0
        %559 = vmatpush1.msra.mxu0 %v471
        %560 = vmatprep.subr.mxu0 0.0
        %561 = vmatpush1.msra.mxu0 %v472
        %562 = vmatprep.subr.mxu0 0.0
        %563 = vmatpush1.msra.mxu0 0.0
        %564 = vmatprep.subr.mxu0 0.0
        %565 = vmatpush1.msra.mxu0 0.0
        %566 = vmatprep.subr.mxu0 0.0
        %567 = vmatpush1.msra.mxu0 0.0
        %568 = vmatprep.subr.mxu0 0.0
        %569 = vmatpush1.msra.mxu0 0.0
        %570 = vmatprep.subr.mxu0 0.0
        %571 = vmatpush1.msra.mxu0 0.0
        %572 = vmatprep.subr.mxu0 0.0
        %573 = vmatpush1.msra.mxu0 0.0
        %574 = vmatprep.subr.mxu0 0.0
        %575 = vmatpush1.msra.mxu0 0.0
        %576 = vmatprep.subr.mxu0 0.0
        %577 = vmatpush1.msra.mxu0 0.0
        %578 = vmatprep.subr.mxu0 0.0
        %579 = vmatpush1.msra.mxu0 0.0
        %580 = vmatprep.subr.mxu0 0.0
        %581 = vmatpush1.msra.mxu0 0.0
        %582 = vmatprep.subr.mxu0 0.0
        %583 = vmatpush1.msra.mxu0 0.0
        %584 = vmatprep.subr.mxu0 0.0
        %585 = vmatpush1.msra.mxu0 0.0
        %586 = vmatprep.subr.mxu0 0.0
        %587 = vmatpush1.msra.mxu0 0.0
        %588 = vmatprep.subr.mxu0 0.0
        %589 = vmatpush1.msra.mxu0 0.0
        %590 = vmatprep.subr.mxu0 0.0
        %591 = vmatpush1.msra.mxu0 0.0
        %592 = vmatprep.subr.mxu0 0.0
        %593 = vmatpush1.msra.mxu0 0.0
        %594 = vmatprep.subr.mxu0 0.0
        %595 = vmatpush1.msra.mxu0 0.0
        %596 = vmatprep.subr.mxu0 0.0
        %597 = vmatpush1.msra.mxu0 0.0
        %598 = vmatprep.subr.mxu0 0.0
        %599 = vmatpush1.msra.mxu0 0.0
        %600 = vmatprep.subr.mxu0 0.0
        %601 = vmatpush1.msra.mxu0 0.0
        %602 = vmatprep.subr.mxu0 0.0
        %603 = vmatpush1.msra.mxu0 0.0
        %604 = vmatprep.subr.mxu0 0.0
        %605 = vmatpush1.msra.mxu0 0.0
        %606 = vmatprep.subr.mxu0 0.0
        %607 = vmatpush1.msra.mxu0 0.0
        %608 = vmatprep.subr.mxu0 0.0
        %609 = vmatpush1.msra.mxu0 0.0
        %610 = vmatprep.subr.mxu0 0.0
        %611 = vmatpush1.msra.mxu0 0.0
        %612 = vmatprep.subr.mxu0 0.0
        %613 = vmatpush1.msra.mxu0 0.0
        %614 = vmatprep.subr.mxu0 0.0
        %615 = vmatpush1.msra.mxu0 0.0
        %616 = vmatprep.subr.mxu0 0.0
        %617 = vmatpush1.msra.mxu0 0.0
        %618 = vmatprep.mubr.f32.mxu0 0.0
        %619 = vmatmul.mubr.f32.gmra.mrb[0].mxu0 %v552
        %v620 = vpop.f32.mrb[0].mxu0
        %v621 = vadd.f32 %v548, %v620
        %v622 = vpop.f32.mrb[0].mxu0
        %623 = vdwg.mxu0
        %v624 = vld [vmem:[%s5] sm:$0x1]
        %v626 = vlaneseq
        %v627 = vshrl.u32 %v626, 7
        %v628 = vsub.s32 0, %v627
        %v629 = vrot.slane %v624, %v628
        %v631 = vadd.f32 %v621, %v629
        %vm632 = vcmask 64512
        %v633 = vsel %vm632, %v631, -inf
        %634 = vmax.xlane.f32.xlu0 %v633
        %v635 = vpop.xlane.xlu0 %634
        %v636 = vsub.f32 %v631, %v635
        %v637 = vmul.f32 %v636, 1.442695
        %v638 = vpow.pop %v637
        %v639 = vsel %vm632, %v638, 0.0
        %640 = vadd.xlane.f32.xlu0 %v639
        %v641 = vpop.xlane.xlu0 %640
        %v642 = vrcp.pop %v641
        %v643 = vmul.f32 %v638, %v642
        %v644 = vld [vmem:[%s424] sm:$0xff]
        %v645 = vld [vmem:[%s424 + $0x8] sm:$0xff]
        %v646 = vld [vmem:[%s424 + $0x10] sm:$0xff]
        %v647 = vld [vmem:[%s424 + $0x18] sm:$0xff]
        %v648 = vld [vmem:[%s424 + $0x20] sm:$0xff]
        %v649 = vld [vmem:[%s424 + $0x28] sm:$0xff]
        %v650 = vld [vmem:[%s424 + $0x30] sm:$0xff]
        %v651 = vld [vmem:[%s424 + $0x38] sm:$0xff]
        %652 = vxpose.xlu0.b32.start [1/16] %v643, 128
        %653 = vxpose.xlu0.b32.cont [2/16] 0.0, 128
        %654 = vxpose.xlu0.b32.cont [3/16] 0.0, 128
        %655 = vxpose.xlu0.b32.cont [4/16] 0.0, 128
        %656 = vxpose.xlu0.b32.cont [5/16] 0.0, 128
        %657 = vxpose.xlu0.b32.cont [6/16] 0.0, 128
        %658 = vxpose.xlu0.b32.cont [7/16] 0.0, 128
        %659 = vxpose.xlu0.b32.cont [8/16] 0.0, 128
        %660 = vxpose.xlu0.b32.cont [9/16] 0.0, 128
        %661 = vxpose.xlu0.b32.cont [10/16] 0.0, 128
        %662 = vxpose.xlu0.b32.cont [11/16] 0.0, 128
        %663 = vxpose.xlu0.b32.cont [12/16] 0.0, 128
        %664 = vxpose.xlu0.b32.cont [13/16] 0.0, 128
        %665 = vxpose.xlu0.b32.cont [14/16] 0.0, 128
        %666 = vxpose.xlu0.b32.cont [15/16] 0.0, 128
        %667 = vxpose.xlu0.b32.end [16/16] 0.0, 128
        %v668 = vpop.trf.xlu0
        %v669 = vpop.trf.xlu0
        %v670 = vpop.trf.xlu0
        %v671 = vpop.trf.xlu0
        %v672 = vpop.trf.xlu0
        %v673 = vpop.trf.xlu0
        %v674 = vpop.trf.xlu0
        %v675 = vpop.trf.xlu0
        %v676 = vpop.trf.xlu0
        %v677 = vpop.trf.xlu0
        %v678 = vpop.trf.xlu0
        %v679 = vpop.trf.xlu0
        %v680 = vpop.trf.xlu0
        %v681 = vpop.trf.xlu0
        %v682 = vpop.trf.xlu0
        %v683 = vpop.trf.xlu0
        %v684 = vlaneseq
        %v685 = vshrl.u32 %v684, 7
        %v686 = vsub.s32 0, %v685
        %v687 = vrot.slane %v668, %v686
        %689 = vbcast.lane.b32.xlu0 %v687, 256
        %v690 = vpop.permute.xlu0 %689
        %v691 = vlaneseq
        %v692 = vshrl.u32 %v691, 7
        %v693 = vsub.s32 1, %v692
        %v694 = vrot.slane %v668, %v693
        %696 = vbcast.lane.b32.xlu0 %v694, 256
        %v697 = vpop.permute.xlu0 %696
        %v698 = vlaneseq
        %v699 = vshrl.u32 %v698, 7
        %v700 = vsub.s32 2, %v699
        %v701 = vrot.slane %v668, %v700
        %703 = vbcast.lane.b32.xlu0 %v701, 256
        %v704 = vpop.permute.xlu0 %703
        %v705 = vlaneseq
        %v706 = vshrl.u32 %v705, 7
        %v707 = vsub.s32 3, %v706
        %v708 = vrot.slane %v668, %v707
        %710 = vbcast.lane.b32.xlu0 %v708, 256
        %v711 = vpop.permute.xlu0 %710
        %v712 = vlaneseq
        %v713 = vshrl.u32 %v712, 7
        %v714 = vsub.s32 4, %v713
        %v715 = vrot.slane %v668, %v714
        %717 = vbcast.lane.b32.xlu0 %v715, 256
        %v718 = vpop.permute.xlu0 %717
        %v719 = vlaneseq
        %v720 = vshrl.u32 %v719, 7
        %v721 = vsub.s32 5, %v720
        %v722 = vrot.slane %v668, %v721
        %724 = vbcast.lane.b32.xlu0 %v722, 256
        %v725 = vpop.permute.xlu0 %724
        %v726 = vlaneseq
        %v727 = vshrl.u32 %v726, 7
        %v728 = vsub.s32 6, %v727
        %v729 = vrot.slane %v668, %v728
        %731 = vbcast.lane.b32.xlu0 %v729, 256
        %v732 = vpop.permute.xlu0 %731
        %v733 = vlaneseq
        %v734 = vshrl.u32 %v733, 7
        %v735 = vsub.s32 7, %v734
        %v736 = vrot.slane %v668, %v735
        %738 = vbcast.lane.b32.xlu0 %v736, 256
        %v739 = vpop.permute.xlu0 %738
        %v740 = vmul.f32 %v690, %v644
        %v741 = vmul.f32 %v697, %v645
        %v742 = vmul.f32 %v704, %v646
        %v743 = vmul.f32 %v711, %v647
        %v744 = vmul.f32 %v718, %v648
        %v745 = vmul.f32 %v725, %v649
        %v746 = vmul.f32 %v732, %v650
        %v747 = vmul.f32 %v739, %v651
        %vm748 = vcmask 523264
        %v749 = vsel %vm748, %v740, 0.0
        %v750 = vsel %vm748, %v741, 0.0
        %v751 = vadd.f32 %v749, %v750
        %v752 = vsel %vm748, %v742, 0.0
        %v753 = vadd.f32 %v751, %v752
        %v754 = vsel %vm748, %v743, 0.0
        %v755 = vadd.f32 %v753, %v754
        %v756 = vsel %vm748, %v744, 0.0
        %v757 = vadd.f32 %v755, %v756
        %v758 = vsel %vm748, %v745, 0.0
        %v759 = vadd.f32 %v757, %v758
        %v760 = vsel %vm748, %v746, 0.0
        %v761 = vadd.f32 %v759, %v760
        %v762 = vsel %vm748, %v747, 0.0
        %v763 = vadd.f32 %v761, %v762
        %v764 = vld [vmem:[%s6] sm:$0xff]
        %v765 = vld [vmem:[%s6 + $0x8] sm:$0xff]
        %v766 = vld [vmem:[%s6 + $0x10] sm:$0xff]
        %v767 = vld [vmem:[%s6 + $0x18] sm:$0xff]
        %v768 = vld [vmem:[%s7] sm:$0xff]
        %v769 = vld [vmem:[%s7 + $0x8] sm:$0xff]
        %v770 = vld [vmem:[%s7 + $0x10] sm:$0xff]
        %v771 = vld [vmem:[%s7 + $0x18] sm:$0xff]
        %v772 = vld [vmem:[%s7 + $0x20] sm:$0xff]
        %v773 = vld [vmem:[%s7 + $0x28] sm:$0xff]
        %v774 = vld [vmem:[%s7 + $0x30] sm:$0xff]
        %v775 = vld [vmem:[%s7 + $0x38] sm:$0xff]
        %v777 = vsel %vm748, %v763, 0
        %779 = vmatprep.subr.mxu0 0.0
        %780 = vmatpush1.msra.mxu0 %v768
        %781 = vmatprep.subr.mxu0 0.0
        %782 = vmatpush1.msra.mxu0 %v769
        %783 = vmatprep.subr.mxu0 0.0
        %784 = vmatpush1.msra.mxu0 %v770
        %785 = vmatprep.subr.mxu0 0.0
        %786 = vmatpush1.msra.mxu0 %v771
        %787 = vmatprep.subr.mxu0 0.0
        %788 = vmatpush1.msra.mxu0 %v772
        %789 = vmatprep.subr.mxu0 0.0
        %790 = vmatpush1.msra.mxu0 %v773
        %791 = vmatprep.subr.mxu0 0.0
        %792 = vmatpush1.msra.mxu0 %v774
        %793 = vmatprep.subr.mxu0 0.0
        %794 = vmatpush1.msra.mxu0 %v775
        %795 = vmatprep.subr.mxu0 0.0
        %796 = vmatpush1.msra.mxu0 0.0
        %797 = vmatprep.subr.mxu0 0.0
        %798 = vmatpush1.msra.mxu0 0.0
        %799 = vmatprep.subr.mxu0 0.0
        %800 = vmatpush1.msra.mxu0 0.0
        %801 = vmatprep.subr.mxu0 0.0
        %802 = vmatpush1.msra.mxu0 0.0
        %803 = vmatprep.subr.mxu0 0.0
        %804 = vmatpush1.msra.mxu0 0.0
        %805 = vmatprep.subr.mxu0 0.0
        %806 = vmatpush1.msra.mxu0 0.0
        %807 = vmatprep.subr.mxu0 0.0
        %808 = vmatpush1.msra.mxu0 0.0
        %809 = vmatprep.subr.mxu0 0.0
        %810 = vmatpush1.msra.mxu0 0.0
        %811 = vmatprep.subr.mxu0 0.0
        %812 = vmatpush1.msra.mxu0 0.0
        %813 = vmatprep.subr.mxu0 0.0
        %814 = vmatpush1.msra.mxu0 0.0
        %815 = vmatprep.subr.mxu0 0.0
        %816 = vmatpush1.msra.mxu0 0.0
        %817 = vmatprep.subr.mxu0 0.0
        %818 = vmatpush1.msra.mxu0 0.0
        %819 = vmatprep.subr.mxu0 0.0
        %820 = vmatpush1.msra.mxu0 0.0
        %821 = vmatprep.subr.mxu0 0.0
        %822 = vmatpush1.msra.mxu0 0.0
        %823 = vmatprep.subr.mxu0 0.0
        %824 = vmatpush1.msra.mxu0 0.0
        %825 = vmatprep.subr.mxu0 0.0
        %826 = vmatpush1.msra.mxu0 0.0
        %827 = vmatprep.subr.mxu0 0.0
        %828 = vmatpush1.msra.mxu0 0.0
        %829 = vmatprep.subr.mxu0 0.0
        %830 = vmatpush1.msra.mxu0 0.0
        %831 = vmatprep.subr.mxu0 0.0
        %832 = vmatpush1.msra.mxu0 0.0
        %833 = vmatprep.subr.mxu0 0.0
        %834 = vmatpush1.msra.mxu0 0.0
        %835 = vmatprep.subr.mxu0 0.0
        %836 = vmatpush1.msra.mxu0 0.0
        %837 = vmatprep.subr.mxu0 0.0
        %838 = vmatpush1.msra.mxu0 0.0
        %839 = vmatprep.subr.mxu0 0.0
        %840 = vmatpush1.msra.mxu0 0.0
        %841 = vmatprep.subr.mxu0 0.0
        %842 = vmatpush1.msra.mxu0 0.0
        %843 = vmatprep.mubr.f32.mxu0 0.0
        %844 = vmatmul.mubr.f32.gmra.mrb[0].mxu0 %v777
        %v845 = vpop.f32.mrb[0].mxu0
        %v846 = vadd.f32 0.0, %v845
        %v847 = vpop.f32.mrb[0].mxu0
        %848 = vdwg.mxu0
        %849 = vmatprep.subr.mxu0 0.0
        %850 = vmatpush1.msra.mxu0 %v764
        %851 = vmatprep.subr.mxu0 0.0
        %852 = vmatpush1.msra.mxu0 %v765
        %853 = vmatprep.subr.mxu0 0.0
        %854 = vmatpush1.msra.mxu0 %v766
        %855 = vmatprep.subr.mxu0 0.0
        %856 = vmatpush1.msra.mxu0 %v767
        %857 = vmatprep.subr.mxu0 0.0
        %858 = vmatpush1.msra.mxu0 0.0
        %859 = vmatprep.subr.mxu0 0.0
        %860 = vmatpush1.msra.mxu0 0.0
        %861 = vmatprep.subr.mxu0 0.0
        %862 = vmatpush1.msra.mxu0 0.0
        %863 = vmatprep.subr.mxu0 0.0
        %864 = vmatpush1.msra.mxu0 0.0
        %865 = vmatprep.subr.mxu0 0.0
        %866 = vmatpush1.msra.mxu0 0.0
        %867 = vmatprep.subr.mxu0 0.0
        %868 = vmatpush1.msra.mxu0 0.0
        %869 = vmatprep.subr.mxu0 0.0
        %870 = vmatpush1.msra.mxu0 0.0
        %871 = vmatprep.subr.mxu0 0.0
        %872 = vmatpush1.msra.mxu0 0.0
        %873 = vmatprep.subr.mxu0 0.0
        %874 = vmatpush1.msra.mxu0 0.0
        %875 = vmatprep.subr.mxu0 0.0
        %876 = vmatpush1.msra.mxu0 0.0
        %877 = vmatprep.subr.mxu0 0.0
        %878 = vmatpush1.msra.mxu0 0.0
        %879 = vmatprep.subr.mxu0 0.0
        %880 = vmatpush1.msra.mxu0 0.0
        %881 = vmatprep.subr.mxu0 0.0
        %882 = vmatpush1.msra.mxu0 0.0
        %883 = vmatprep.subr.mxu0 0.0
        %884 = vmatpush1.msra.mxu0 0.0
        %885 = vmatprep.subr.mxu0 0.0
        %886 = vmatpush1.msra.mxu0 0.0
        %887 = vmatprep.subr.mxu0 0.0
        %888 = vmatpush1.msra.mxu0 0.0
        %889 = vmatprep.subr.mxu0 0.0
        %890 = vmatpush1.msra.mxu0 0.0
        %891 = vmatprep.subr.mxu0 0.0
        %892 = vmatpush1.msra.mxu0 0.0
        %893 = vmatprep.subr.mxu0 0.0
        %894 = vmatpush1.msra.mxu0 0.0
        %895 = vmatprep.subr.mxu0 0.0
        %896 = vmatpush1.msra.mxu0 0.0
        %897 = vmatprep.subr.mxu0 0.0
        %898 = vmatpush1.msra.mxu0 0.0
        %899 = vmatprep.subr.mxu0 0.0
        %900 = vmatpush1.msra.mxu0 0.0
        %901 = vmatprep.subr.mxu0 0.0
        %902 = vmatpush1.msra.mxu0 0.0
        %903 = vmatprep.subr.mxu0 0.0
        %904 = vmatpush1.msra.mxu0 0.0
        %905 = vmatprep.subr.mxu0 0.0
        %906 = vmatpush1.msra.mxu0 0.0
        %907 = vmatprep.subr.mxu0 0.0
        %908 = vmatpush1.msra.mxu0 0.0
        %909 = vmatprep.subr.mxu0 0.0
        %910 = vmatpush1.msra.mxu0 0.0
        %911 = vmatprep.subr.mxu0 0.0
        %912 = vmatpush1.msra.mxu0 0.0
        %913 = vmatprep.mubr.f32.mxu0 0.0
        %914 = vmatmul.mubr.f32.gmra.mrb[0].mxu0 %v552
        %v915 = vpop.f32.mrb[0].mxu0
        %v916 = vadd.f32 %v846, %v915
        %v917 = vpop.f32.mrb[0].mxu0
        %918 = vdwg.mxu0
        %v919 = vld [vmem:[%s8] sm:$0x1]
        %v921 = vlaneseq
        %v922 = vshrl.u32 %v921, 7
        %v923 = vsub.s32 0, %v922
        %v924 = vrot.slane %v919, %v923
        %v926 = vadd.f32 %v916, %v924
        %927 = vst.msk [vmem:[%s466] sm:$0xff] %vm477, %v926
        %s928 = sand.u32 %s241, 1
        %s929 = scalar_lea.sflag [#allocation4], %s928
        %s930 = sand.u32 %s241, 1
        %s931 = smul.addr %s930, 8
        %s932 = scalar_lea.vmem [#allocation8], %s931
        // Predicated region
        $region103: #{tpu_custom_call.1} parent=89 // pred_check
          %p933 = pneg %p251
        $region104: #{tpu_custom_call.1} parent=89 // pred_check_branch
          %935 = sbr.rel (%p933) target = $region106
        $region105: #{tpu_custom_call.1} parent=89 // pred_region
          %s937 = ssub.s32 128, 128
          %938 = vsyncadd %s929, %s937
          %s939 = smul.addr %s29, 128
          %s940 = scalar_lea.hbm %s9, %s939
          %s942 = sshll.u32 %s932, 4
          %s943 = int_to_ptr.vmem [resolvable:$true] %s942
          %945 = dma.vmem_to_hbm [thread:$0]  %s943, 128, %s940, %s929
        $region106: #{tpu_custom_call.1} parent=89 // pred_fallthru
          _
      $region90: #{tpu_custom_call.1} parent=5 // pred_fallthru
        _
      %p946 = scmp.le.s32.totalorder 2, %s24
      // Predicated region
      $region107: #{tpu_custom_call.1} parent=5 // pred_check
        %p947 = pneg %p946
      $region108: #{tpu_custom_call.1} parent=5 // pred_check_branch
        %949 = sbr.rel (%p947) target = $region110
      $region109: #{tpu_custom_call.1} parent=5 // pred_region
        %s950 = ssub.s32 %s24, 2
        // Predicated region
        $region111: #{tpu_custom_call.1} parent=109 // pred_check
          %p951 = pneg %p257
        $region112: #{tpu_custom_call.1} parent=109 // pred_check_branch
          %953 = sbr.rel (%p951) target = $region114
        $region113: #{tpu_custom_call.1} parent=109 // pred_region
          %s954 = sand.u32 %s242, 1
          %s955 = scalar_lea.sflag [#allocation4], %s954
          %s956 = sand.u32 %s242, 1
          %s957 = smul.addr %s956, 8
          %s958 = scalar_lea.vmem [#allocation8], %s957
          %959 = dma.done %s955, 128
        $region114: #{tpu_custom_call.1} parent=109 // pred_fallthru
          _
      $region110: #{tpu_custom_call.1} parent=5 // pred_fallthru
        _
    $region6: #{tpu_custom_call.1} parent=1 // loop_footer
      %s28 = sadd.s32 1, %s24
    $region7: #{tpu_custom_call.1} parent=1 // loop_footer_branch
      %23 = sbr.rel target = $region3
    $region8: #{tpu_custom_call.1} parent=1 // loop_exit
      _
    %960 = vsyncpa [#allocation3], 1
    %s961 = scalar_lea.sflag [#allocation3], 1
    %962 = vsyncpa %s961, 1
    %963 = vsyncpa [#allocation6], 1
    %s964 = scalar_lea.sflag [#allocation6], 1
    %965 = vsyncpa %s964, 1
    %966 = vsyncpa [#allocation4], 1
    %s967 = scalar_lea.sflag [#allocation4], 1
    %968 = vsyncpa %s967, 1

</llo_original>
